<compile_context>
chip_gen: v7x
topology: tpu7x:2x2x1
jax: 0.10.0
libtpu: 0.0.40
codegen_flags: <defaults>
</compile_context>

<pallas_src>
import functools

import numpy as np
import jax
import jax.numpy as jnp
from jax.experimental import pallas as pl
from jax.experimental.pallas import tpu as pltpu


_CP = 8  # padded input-channel tile height (f32 sublane count)


# ----------------------------------------------------------------------------
# Fused Pallas kernel: Conv3x3(+bias)+ReLU -> Conv3x3(+bias)+ReLU, grid=()
# ----------------------------------------------------------------------------
def _fused_net_kernel(x_ref, mask_ref, w1_ref, b1_ref, w2_ref, b2_ref,
                      a1_ref, a3_ref, xf_ref, patches_ref, *, N, H, W, Cin):
    """Lane-dense layout: channels on sublanes, batch*space (N*H*W) on lanes.

    x_ref:       (N, Cin, H*W)   NCHW input with HW flattened (pure reshape)
    mask_ref:    (8, N*H*W)      f32 0/1 boundary masks (one row per non-center tap)
    w1_ref:      (C1, 9*_CP)     conv1 weights, tap-major / cin-minor, cin padded
    b1_ref:      (C1, 1)
    w2_ref:      (C2, 9*_CP)
    b2_ref:      (C2, 1)
    a1_ref:      (N, C1, H*W)    post-ReLU activation of layer index 1
    a3_ref:      (N, C2, H*W)    post-ReLU activation of layer index 3
    xf_ref:      (_CP, N*H*W)    scratch: folded + channel-padded input
    patches_ref: (9*_CP, N*H*W)  scratch: im2col rows, reused by both convs
    """
    HW = H * W
    NHW = N * HW

    # ---- Fold (N, Cin, HW) -> (_CP, N*HW); zero the padded channel rows. ----
    xf_ref[...] = jnp.zeros_like(xf_ref)
    for n in range(N):
        xf_ref[pl.ds(0, Cin), pl.ds(n * HW, HW)] = x_ref[n]

    offsets = [(oy, ox) for oy in (-1, 0, 1) for ox in (-1, 0, 1)]
    masks = mask_ref[...]                          # (8, NHW) constant 0/1

    def build_patches(src):
        # src: (_CP, NHW) value.  A global lane roll over the folded N*HW axis
        # plus the per-tap boundary mask yields each im2col row block; any
        # cross-image wrap lands on masked (zeroed) lanes.  Stores are at
        # 8-sublane-aligned offsets into the scratch (unmasked vst).
        for t, (oy, ox) in enumerate(offsets):
            k = oy * W + ox
            if k == 0:                             # center tap: always valid
                tap = src
            else:
                m = t if t < 4 else t - 1          # mask row (center skipped)
                tap = pltpu.roll(src, shift=(-k) % NHW, axis=1) * masks[m:m + 1, :]
            patches_ref[pl.ds(t * _CP, _CP), :] = tap

    def conv_relu(w_ref, b_ref):
        # Single K=(9*_CP) MXU matmul with fused bias + ReLU epilogue (f32).
        out = jnp.dot(w_ref[...], patches_ref[...],
                      preferred_element_type=jnp.float32)
        return jnp.maximum(out + b_ref[...], 0.0)

    # ---- layers 0/1: conv1 + ReLU ----
    build_patches(xf_ref[...])
    h1 = conv_relu(w1_ref, b1_ref)                 # (C1, NHW)
    for n in range(N):                             # unfold to (N, C1, HW)
        a1_ref[n] = h1[:, n * HW:(n + 1) * HW]

    # ---- layers 2/3: conv2 + ReLU ----
    build_patches(h1)
    h3 = conv_relu(w2_ref, b2_ref)                 # (C2, NHW)
    for n in range(N):
        a3_ref[n] = h3[:, n * HW:(n + 1) * HW]


# ----------------------------------------------------------------------------
# Host-side helpers (run once, outside the jitted forward)
# ----------------------------------------------------------------------------
def _flatten_conv_weight(w_oihw, cin_pad):
    """OIHW -> (Cout, 9*cin_pad): tap-major / cin-minor, cin zero-padded."""
    cout, cin, kh, kw = w_oihw.shape
    w = jnp.transpose(w_oihw, (0, 2, 3, 1))               # (Cout, kh, kw, Cin)
    if cin < cin_pad:
        w = jnp.pad(w, ((0, 0), (0, 0), (0, 0), (0, cin_pad - cin)))
    return jnp.asarray(w.reshape(cout, kh * kw * cin_pad), dtype=jnp.float32)


def _boundary_masks(N, H, W):
    """(8, N*H*W) f32 0/1 validity masks for the eight non-center 3x3 taps."""
    HW = H * W
    p = np.arange(N * HW) % HW
    row, col = p // W, p % W
    rows = []
    for oy in (-1, 0, 1):
        for ox in (-1, 0, 1):
            if oy == 0 and ox == 0:
                continue
            rows.append((row + oy >= 0) & (row + oy < H) &
                        (col + ox >= 0) & (col + ox < W))
    return np.stack(rows).astype(np.float32)


# ----------------------------------------------------------------------------
# Jitted forward: pure reshapes around a single grid=() pallas_call
# ----------------------------------------------------------------------------
@jax.jit
def fused_forward(x_nchw, w1f, b1c, w2f, b2c):
    """Conv->ReLU->Conv->ReLU; returns the two post-ReLU activations (layer
    indices 1 and 3) in PyTorch NCHW layout."""
    N, Cin, H, W = x_nchw.shape
    HW = H * W
    C1, C2 = w1f.shape[0], w2f.shape[0]
    assert Cin <= _CP and C1 == _CP, "kernel assumes Cin<=8 and C1==8"

    x_flat = x_nchw.reshape(N, Cin, HW)              # pure reshape, no transpose
    masks = jnp.asarray(_boundary_masks(N, H, W))    # trace-time constant

    kernel = functools.partial(_fused_net_kernel, N=N, H=H, W=W, Cin=Cin)
    vmem = lambda: pl.BlockSpec(memory_space=pltpu.MemorySpace.VMEM)
    a1_flat, a3_flat = pl.pallas_call(
        kernel,
        out_shape=(
            jax.ShapeDtypeStruct((N, C1, HW), jnp.float32),
            jax.ShapeDtypeStruct((N, C2, HW), jnp.float32),
        ),
        in_specs=[vmem() for _ in range(6)],
        out_specs=(vmem(), vmem()),
        scratch_shapes=[
            pltpu.VMEM((_CP, N * HW), jnp.float32),        # folded input
            pltpu.VMEM((9 * _CP, N * HW), jnp.float32),    # im2col patches
        ],
    )(x_flat, masks, w1f, b1c, w2f, b2c)

    return (a1_flat.reshape(N, C1, H, W), a3_flat.reshape(N, C2, H, W))


# ----------------------------------------------------------------------------
# NetWithActivations equivalent
# ----------------------------------------------------------------------------
class NetWithActivations:
    """Mirrors the PyTorch module: resolves (possibly negative) layer indices
    of the wrapped 4-layer model (Conv, ReLU, Conv, ReLU) and returns
    {layer_index: activation}.  The forward pass is one fused Pallas call."""
    # TODO(synk): the PyTorch module wraps an arbitrary model's children; only
    # the concrete synthetic Conv-ReLU-Conv-ReLU model (post-ReLU activations,
    # layer indices 1 and 3) is implemented here.

    NUM_LAYERS = 4  # Conv2d, ReLU, Conv2d, ReLU

    def __init__(self, params, layer_nums):
        w1, b1, w2, b2 = params
        # Weight/bias reformatting hoisted here: done once, not per forward.
        self._w1f = _flatten_conv_weight(w1, _CP)
        self._w2f = _flatten_conv_weight(w2, _CP)
        self._b1c = jnp.asarray(b1, jnp.float32).reshape(-1, 1)
        self._b2c = jnp.asarray(b2, jnp.float32).reshape(-1, 1)

        nums = set()
        for l in layer_nums:
            nums.add(self.NUM_LAYERS + l if l < 0 else l)
        self.layer_nums = nums
        assert self.layer_nums <= {1, 3}, (
            "fused kernel exposes the post-ReLU activations (layers 1 and 3)")

    def forward(self, x):
        a1, a3 = fused_forward(x, self._w1f, self._b1c, self._w2f, self._b2c)
        activations = {}
        if 1 in self.layer_nums:
            activations[1] = a1
        if 3 in self.layer_nums:
            activations[3] = a3
        return activations


# ----------------------------------------------------------------------------
# Pure-JAX reference (correctness check only)
# ----------------------------------------------------------------------------
def _ref_forward(x, w1, b1, w2, b2):
    def conv(x, w, b):
        y = jax.lax.conv_general_dilated(
            x, w, window_strides=(1, 1), padding="SAME",
            dimension_numbers=("NCHW", "OIHW", "NCHW"))
        return y + b.reshape(1, -1, 1, 1)

    h1 = jnp.maximum(conv(x, w1, b1), 0.0)
    h3 = jnp.maximum(conv(h1, w2, b2), 0.0)
    return h1, h3


# ----------------------------------------------------------------------------
# Main
# ----------------------------------------------------------------------------
if __name__ == "__main__":
    key = jax.random.PRNGKey(0)
    k_x, k_w1, k_b1, k_w2, k_b2 = jax.random.split(key, 5)

    N, C, H, W = 2, 4, 16, 16
    C1 = 8  # channels after first conv
    C2 = 8  # channels after second conv

    # Deterministic synthetic parameters (no checkpoint loading).
    x = jax.random.normal(k_x, (N, C, H, W), dtype=jnp.float32)
    w1 = 0.1 * jax.random.normal(k_w1, (C1, C, 3, 3), dtype=jnp.float32)
    b1 = 0.01 * jax.random.normal(k_b1, (C1,), dtype=jnp.float32)
    w2 = 0.1 * jax.random.normal(k_w2, (C2, C1, 3, 3), dtype=jnp.float32)
    b2 = 0.01 * jax.random.normal(k_b2, (C2,), dtype=jnp.float32)

    net = NetWithActivations((w1, b1, w2, b2), layer_nums=[1, -1])  # -> {1, 3}
    activations = net.forward(x)
    for act in activations.values():
        jax.block_until_ready(act)

    # Sanity: correct keys and shapes.
    assert sorted(activations.keys()) == [1, 3]
    assert activations[1].shape == (N, C1, H, W)
    assert activations[3].shape == (N, C2, H, W)

    # Numerical check against a pure-JAX reference of the wrapped model.
    r1, r3 = _ref_forward(x, w1, b1, w2, b2)
    assert jnp.allclose(activations[1], r1, atol=1e-4, rtol=1e-4)
    assert jnp.allclose(activations[3], r3, atol=1e-4, rtol=1e-4)

    print("KERNEL_OK")
</pallas_src>

<mosaic_0001>
module attributes {stable_mosaic.version = 11 : i64} {
  func.func @_fused_net_kernel(%arg0: memref<2x4x256xf32, #tpu.memory_space<vmem>>, %arg1: memref<8x512xf32, #tpu.memory_space<vmem>>, %arg2: memref<8x72xf32, #tpu.memory_space<vmem>>, %arg3: memref<8x1xf32, #tpu.memory_space<vmem>>, %arg4: memref<8x72xf32, #tpu.memory_space<vmem>>, %arg5: memref<8x1xf32, #tpu.memory_space<vmem>>, %arg6: memref<2x8x256xf32, #tpu.memory_space<vmem>>, %arg7: memref<2x8x256xf32, #tpu.memory_space<vmem>>, %arg8: memref<8x512xf32, #tpu.memory_space<vmem>>, %arg9: memref<72x512xf32, #tpu.memory_space<vmem>>) attributes {dimension_semantics = [], scalar_prefetch = 0 : i64, scratch_operands = 2 : i64, tpu.core_type = #tpu.core_type<tc>} {
    %cst = arith.constant 0.000000e+00 : f32
    %0 = vector.broadcast %cst : f32 to vector<8x512xf32>
    %c0 = arith.constant 0 : index
    %c0_0 = arith.constant 0 : index
    %1 = vector.load %arg8[%c0, %c0_0] : memref<8x512xf32, #tpu.memory_space<vmem>>, vector<8x512xf32>
    tpu.vector_store %arg8[%c0, %c0_0], %0 {strides = array<i32>} : memref<8x512xf32, #tpu.memory_space<vmem>>, vector<8x512xf32>,
    %c0_1 = arith.constant 0 : index
    %c0_2 = arith.constant 0 : index
    %c0_3 = arith.constant 0 : index
    %2 = vector.load %arg0[%c0_1, %c0_2, %c0_3] : memref<2x4x256xf32, #tpu.memory_space<vmem>>, vector<1x4x256xf32>
    %3 = vector.shape_cast %2 : vector<1x4x256xf32> to vector<4x256xf32>
    %c0_4 = arith.constant 0 : index
    %c0_5 = arith.constant 0 : index
    %4 = vector.load %arg8[%c0_4, %c0_5] : memref<8x512xf32, #tpu.memory_space<vmem>>, vector<4x256xf32>
    tpu.vector_store %arg8[%c0_4, %c0_5], %3 {strides = array<i32>} : memref<8x512xf32, #tpu.memory_space<vmem>>, vector<4x256xf32>,
    %c1 = arith.constant 1 : index
    %c0_6 = arith.constant 0 : index
    %c0_7 = arith.constant 0 : index
    %5 = vector.load %arg0[%c1, %c0_6, %c0_7] : memref<2x4x256xf32, #tpu.memory_space<vmem>>, vector<1x4x256xf32>
    %6 = vector.shape_cast %5 : vector<1x4x256xf32> to vector<4x256xf32>
    %c0_8 = arith.constant 0 : index
    %c256 = arith.constant 256 : index
    %7 = vector.load %arg8[%c0_8, %c256] : memref<8x512xf32, #tpu.memory_space<vmem>>, vector<4x256xf32>
    tpu.vector_store %arg8[%c0_8, %c256], %6 {strides = array<i32>} : memref<8x512xf32, #tpu.memory_space<vmem>>, vector<4x256xf32>,
    %c0_9 = arith.constant 0 : index
    %c0_10 = arith.constant 0 : index
    %8 = vector.load %arg1[%c0_9, %c0_10] : memref<8x512xf32, #tpu.memory_space<vmem>>, vector<8x512xf32>
    %c0_11 = arith.constant 0 : index
    %c0_12 = arith.constant 0 : index
    %9 = vector.load %arg8[%c0_11, %c0_12] : memref<8x512xf32, #tpu.memory_space<vmem>>, vector<8x512xf32>
    %c17_i32 = arith.constant 17 : i32
    %10 = tpu.dynamic_rotate %9 by %c17_i32 dim 1 : vector<8x512xf32>, i32 -> vector<8x512xf32>
    %11 = vector.extract_strided_slice %8 {offsets = [0, 0], sizes = [1, 512], strides = [1, 1]} : vector<8x512xf32> to vector<1x512xf32>
    %12 = vector.broadcast %11 : vector<1x512xf32> to vector<8x512xf32>
    %13 = arith.mulf %10, %12 : vector<8x512xf32>
    %c0_13 = arith.constant 0 : index
    %c0_14 = arith.constant 0 : index
    %14 = vector.load %arg9[%c0_13, %c0_14] : memref<72x512xf32, #tpu.memory_space<vmem>>, vector<8x512xf32>
    tpu.vector_store %arg9[%c0_13, %c0_14], %13 {strides = array<i32>} : memref<72x512xf32, #tpu.memory_space<vmem>>, vector<8x512xf32>,
    %c16_i32 = arith.constant 16 : i32
    %15 = tpu.dynamic_rotate %9 by %c16_i32 dim 1 : vector<8x512xf32>, i32 -> vector<8x512xf32>
    %16 = vector.extract_strided_slice %8 {offsets = [1, 0], sizes = [1, 512], strides = [1, 1]} : vector<8x512xf32> to vector<1x512xf32>
    %17 = vector.broadcast %16 : vector<1x512xf32> to vector<8x512xf32>
    %18 = arith.mulf %15, %17 : vector<8x512xf32>
    %c8 = arith.constant 8 : index
    %c0_15 = arith.constant 0 : index
    %19 = vector.load %arg9[%c8, %c0_15] : memref<72x512xf32, #tpu.memory_space<vmem>>, vector<8x512xf32>
    tpu.vector_store %arg9[%c8, %c0_15], %18 {strides = array<i32>} : memref<72x512xf32, #tpu.memory_space<vmem>>, vector<8x512xf32>,
    %c15_i32 = arith.constant 15 : i32
    %20 = tpu.dynamic_rotate %9 by %c15_i32 dim 1 : vector<8x512xf32>, i32 -> vector<8x512xf32>
    %21 = vector.extract_strided_slice %8 {offsets = [2, 0], sizes = [1, 512], strides = [1, 1]} : vector<8x512xf32> to vector<1x512xf32>
    %22 = vector.broadcast %21 : vector<1x512xf32> to vector<8x512xf32>
    %23 = arith.mulf %20, %22 : vector<8x512xf32>
    %c16 = arith.constant 16 : index
    %c0_16 = arith.constant 0 : index
    %24 = vector.load %arg9[%c16, %c0_16] : memref<72x512xf32, #tpu.memory_space<vmem>>, vector<8x512xf32>
    tpu.vector_store %arg9[%c16, %c0_16], %23 {strides = array<i32>} : memref<72x512xf32, #tpu.memory_space<vmem>>, vector<8x512xf32>,
    %c1_i32 = arith.constant 1 : i32
    %25 = tpu.dynamic_rotate %9 by %c1_i32 dim 1 : vector<8x512xf32>, i32 -> vector<8x512xf32>
    %26 = vector.extract_strided_slice %8 {offsets = [3, 0], sizes = [1, 512], strides = [1, 1]} : vector<8x512xf32> to vector<1x512xf32>
    %27 = vector.broadcast %26 : vector<1x512xf32> to vector<8x512xf32>
    %28 = arith.mulf %25, %27 : vector<8x512xf32>
    %c24 = arith.constant 24 : index
    %c0_17 = arith.constant 0 : index
    %29 = vector.load %arg9[%c24, %c0_17] : memref<72x512xf32, #tpu.memory_space<vmem>>, vector<8x512xf32>
    tpu.vector_store %arg9[%c24, %c0_17], %28 {strides = array<i32>} : memref<72x512xf32, #tpu.memory_space<vmem>>, vector<8x512xf32>,
    %c32 = arith.constant 32 : index
    %c0_18 = arith.constant 0 : index
    %30 = vector.load %arg9[%c32, %c0_18] : memref<72x512xf32, #tpu.memory_space<vmem>>, vector<8x512xf32>
    tpu.vector_store %arg9[%c32, %c0_18], %9 {strides = array<i32>} : memref<72x512xf32, #tpu.memory_space<vmem>>, vector<8x512xf32>,
    %c511_i32 = arith.constant 511 : i32
    %31 = tpu.dynamic_rotate %9 by %c511_i32 dim 1 : vector<8x512xf32>, i32 -> vector<8x512xf32>
    %32 = vector.extract_strided_slice %8 {offsets = [4, 0], sizes = [1, 512], strides = [1, 1]} : vector<8x512xf32> to vector<1x512xf32>
    %33 = vector.broadcast %32 : vector<1x512xf32> to vector<8x512xf32>
    %34 = arith.mulf %31, %33 : vector<8x512xf32>
    %c40 = arith.constant 40 : index
    %c0_19 = arith.constant 0 : index
    %35 = vector.load %arg9[%c40, %c0_19] : memref<72x512xf32, #tpu.memory_space<vmem>>, vector<8x512xf32>
    tpu.vector_store %arg9[%c40, %c0_19], %34 {strides = array<i32>} : memref<72x512xf32, #tpu.memory_space<vmem>>, vector<8x512xf32>,
    %c497_i32 = arith.constant 497 : i32
    %36 = tpu.dynamic_rotate %9 by %c497_i32 dim 1 : vector<8x512xf32>, i32 -> vector<8x512xf32>
    %37 = vector.extract_strided_slice %8 {offsets = [5, 0], sizes = [1, 512], strides = [1, 1]} : vector<8x512xf32> to vector<1x512xf32>
    %38 = vector.broadcast %37 : vector<1x512xf32> to vector<8x512xf32>
    %39 = arith.mulf %36, %38 : vector<8x512xf32>
    %c48 = arith.constant 48 : index
    %c0_20 = arith.constant 0 : index
    %40 = vector.load %arg9[%c48, %c0_20] : memref<72x512xf32, #tpu.memory_space<vmem>>, vector<8x512xf32>
    tpu.vector_store %arg9[%c48, %c0_20], %39 {strides = array<i32>} : memref<72x512xf32, #tpu.memory_space<vmem>>, vector<8x512xf32>,
    %c496_i32 = arith.constant 496 : i32
    %41 = tpu.dynamic_rotate %9 by %c496_i32 dim 1 : vector<8x512xf32>, i32 -> vector<8x512xf32>
    %42 = vector.extract_strided_slice %8 {offsets = [6, 0], sizes = [1, 512], strides = [1, 1]} : vector<8x512xf32> to vector<1x512xf32>
    %43 = vector.broadcast %42 : vector<1x512xf32> to vector<8x512xf32>
    %44 = arith.mulf %41, %43 : vector<8x512xf32>
    %c56 = arith.constant 56 : index
    %c0_21 = arith.constant 0 : index
    %45 = vector.load %arg9[%c56, %c0_21] : memref<72x512xf32, #tpu.memory_space<vmem>>, vector<8x512xf32>
    tpu.vector_store %arg9[%c56, %c0_21], %44 {strides = array<i32>} : memref<72x512xf32, #tpu.memory_space<vmem>>, vector<8x512xf32>,
    %c495_i32 = arith.constant 495 : i32
    %46 = tpu.dynamic_rotate %9 by %c495_i32 dim 1 : vector<8x512xf32>, i32 -> vector<8x512xf32>
    %47 = vector.extract_strided_slice %8 {offsets = [7, 0], sizes = [1, 512], strides = [1, 1]} : vector<8x512xf32> to vector<1x512xf32>
    %48 = vector.broadcast %47 : vector<1x512xf32> to vector<8x512xf32>
    %49 = arith.mulf %46, %48 : vector<8x512xf32>
    %c64 = arith.constant 64 : index
    %c0_22 = arith.constant 0 : index
    %50 = vector.load %arg9[%c64, %c0_22] : memref<72x512xf32, #tpu.memory_space<vmem>>, vector<8x512xf32>
    tpu.vector_store %arg9[%c64, %c0_22], %49 {strides = array<i32>} : memref<72x512xf32, #tpu.memory_space<vmem>>, vector<8x512xf32>,
    %c0_23 = arith.constant 0 : index
    %c0_24 = arith.constant 0 : index
    %51 = vector.load %arg2[%c0_23, %c0_24] : memref<8x72xf32, #tpu.memory_space<vmem>>, vector<8x72xf32>
    %c0_25 = arith.constant 0 : index
    %c0_26 = arith.constant 0 : index
    %52 = vector.load %arg9[%c0_25, %c0_26] : memref<72x512xf32, #tpu.memory_space<vmem>>, vector<72x512xf32>
    %cst_27 = arith.constant dense<0.000000e+00> : vector<8x512xf32>
    %53 = tpu.matmul %51, %52, %cst_27 {dimension_numbers = #tpu.dot_dimension_numbers<[1], [0], [0], [1], [0, 0, 1, 1], [], []>} : vector<8x72xf32>, vector<72x512xf32>, vector<8x512xf32> -> vector<8x512xf32>
    %c0_28 = arith.constant 0 : index
    %c0_29 = arith.constant 0 : index
    %54 = vector.load %arg3[%c0_28, %c0_29] : memref<8x1xf32, #tpu.memory_space<vmem>>, vector<8x1xf32>
    %55 = vector.broadcast %54 : vector<8x1xf32> to vector<8x512xf32>
    %56 = arith.addf %53, %55 : vector<8x512xf32>
    %cst_30 = arith.constant 0.000000e+00 : f32
    %57 = vector.broadcast %cst_30 : f32 to vector<8x512xf32>
    %58 = arith.maximumf %56, %57 : vector<8x512xf32>
    %59 = vector.extract_strided_slice %58 {offsets = [0, 0], sizes = [8, 256], strides = [1, 1]} : vector<8x512xf32> to vector<8x256xf32>
    %c0_31 = arith.constant 0 : index
    %c0_32 = arith.constant 0 : index
    %c0_33 = arith.constant 0 : index
    %60 = vector.load %arg6[%c0_31, %c0_32, %c0_33] : memref<2x8x256xf32, #tpu.memory_space<vmem>>, vector<1x8x256xf32>
    %61 = vector.shape_cast %60 : vector<1x8x256xf32> to vector<8x256xf32>
    %62 = vector.shape_cast %59 : vector<8x256xf32> to vector<1x8x256xf32>
    tpu.vector_store %arg6[%c0_31, %c0_32, %c0_33], %62 {strides = array<i32>} : memref<2x8x256xf32, #tpu.memory_space<vmem>>, vector<1x8x256xf32>,
    %63 = vector.extract_strided_slice %58 {offsets = [0, 256], sizes = [8, 256], strides = [1, 1]} : vector<8x512xf32> to vector<8x256xf32>
    %c1_34 = arith.constant 1 : index
    %c0_35 = arith.constant 0 : index
    %c0_36 = arith.constant 0 : index
    %64 = vector.load %arg6[%c1_34, %c0_35, %c0_36] : memref<2x8x256xf32, #tpu.memory_space<vmem>>, vector<1x8x256xf32>
    %65 = vector.shape_cast %64 : vector<1x8x256xf32> to vector<8x256xf32>
    %66 = vector.shape_cast %63 : vector<8x256xf32> to vector<1x8x256xf32>
    tpu.vector_store %arg6[%c1_34, %c0_35, %c0_36], %66 {strides = array<i32>} : memref<2x8x256xf32, #tpu.memory_space<vmem>>, vector<1x8x256xf32>,
    %c17_i32_37 = arith.constant 17 : i32
    %67 = tpu.dynamic_rotate %58 by %c17_i32_37 dim 1 : vector<8x512xf32>, i32 -> vector<8x512xf32>
    %68 = vector.extract_strided_slice %8 {offsets = [0, 0], sizes = [1, 512], strides = [1, 1]} : vector<8x512xf32> to vector<1x512xf32>
    %69 = vector.broadcast %68 : vector<1x512xf32> to vector<8x512xf32>
    %70 = arith.mulf %67, %69 : vector<8x512xf32>
    %c0_38 = arith.constant 0 : index
    %c0_39 = arith.constant 0 : index
    %71 = vector.load %arg9[%c0_38, %c0_39] : memref<72x512xf32, #tpu.memory_space<vmem>>, vector<8x512xf32>
    tpu.vector_store %arg9[%c0_38, %c0_39], %70 {strides = array<i32>} : memref<72x512xf32, #tpu.memory_space<vmem>>, vector<8x512xf32>,
    %c16_i32_40 = arith.constant 16 : i32
    %72 = tpu.dynamic_rotate %58 by %c16_i32_40 dim 1 : vector<8x512xf32>, i32 -> vector<8x512xf32>
    %73 = vector.extract_strided_slice %8 {offsets = [1, 0], sizes = [1, 512], strides = [1, 1]} : vector<8x512xf32> to vector<1x512xf32>
    %74 = vector.broadcast %73 : vector<1x512xf32> to vector<8x512xf32>
    %75 = arith.mulf %72, %74 : vector<8x512xf32>
    %c8_41 = arith.constant 8 : index
    %c0_42 = arith.constant 0 : index
    %76 = vector.load %arg9[%c8_41, %c0_42] : memref<72x512xf32, #tpu.memory_space<vmem>>, vector<8x512xf32>
    tpu.vector_store %arg9[%c8_41, %c0_42], %75 {strides = array<i32>} : memref<72x512xf32, #tpu.memory_space<vmem>>, vector<8x512xf32>,
    %c15_i32_43 = arith.constant 15 : i32
    %77 = tpu.dynamic_rotate %58 by %c15_i32_43 dim 1 : vector<8x512xf32>, i32 -> vector<8x512xf32>
    %78 = vector.extract_strided_slice %8 {offsets = [2, 0], sizes = [1, 512], strides = [1, 1]} : vector<8x512xf32> to vector<1x512xf32>
    %79 = vector.broadcast %78 : vector<1x512xf32> to vector<8x512xf32>
    %80 = arith.mulf %77, %79 : vector<8x512xf32>
    %c16_44 = arith.constant 16 : index
    %c0_45 = arith.constant 0 : index
    %81 = vector.load %arg9[%c16_44, %c0_45] : memref<72x512xf32, #tpu.memory_space<vmem>>, vector<8x512xf32>
    tpu.vector_store %arg9[%c16_44, %c0_45], %80 {strides = array<i32>} : memref<72x512xf32, #tpu.memory_space<vmem>>, vector<8x512xf32>,
    %c1_i32_46 = arith.constant 1 : i32
    %82 = tpu.dynamic_rotate %58 by %c1_i32_46 dim 1 : vector<8x512xf32>, i32 -> vector<8x512xf32>
    %83 = vector.extract_strided_slice %8 {offsets = [3, 0], sizes = [1, 512], strides = [1, 1]} : vector<8x512xf32> to vector<1x512xf32>
    %84 = vector.broadcast %83 : vector<1x512xf32> to vector<8x512xf32>
    %85 = arith.mulf %82, %84 : vector<8x512xf32>
    %c24_47 = arith.constant 24 : index
    %c0_48 = arith.constant 0 : index
    %86 = vector.load %arg9[%c24_47, %c0_48] : memref<72x512xf32, #tpu.memory_space<vmem>>, vector<8x512xf32>
    tpu.vector_store %arg9[%c24_47, %c0_48], %85 {strides = array<i32>} : memref<72x512xf32, #tpu.memory_space<vmem>>, vector<8x512xf32>,
    %c32_49 = arith.constant 32 : index
    %c0_50 = arith.constant 0 : index
    %87 = vector.load %arg9[%c32_49, %c0_50] : memref<72x512xf32, #tpu.memory_space<vmem>>, vector<8x512xf32>
    tpu.vector_store %arg9[%c32_49, %c0_50], %58 {strides = array<i32>} : memref<72x512xf32, #tpu.memory_space<vmem>>, vector<8x512xf32>,
    %c511_i32_51 = arith.constant 511 : i32
    %88 = tpu.dynamic_rotate %58 by %c511_i32_51 dim 1 : vector<8x512xf32>, i32 -> vector<8x512xf32>
    %89 = vector.extract_strided_slice %8 {offsets = [4, 0], sizes = [1, 512], strides = [1, 1]} : vector<8x512xf32> to vector<1x512xf32>
    %90 = vector.broadcast %89 : vector<1x512xf32> to vector<8x512xf32>
    %91 = arith.mulf %88, %90 : vector<8x512xf32>
    %c40_52 = arith.constant 40 : index
    %c0_53 = arith.constant 0 : index
    %92 = vector.load %arg9[%c40_52, %c0_53] : memref<72x512xf32, #tpu.memory_space<vmem>>, vector<8x512xf32>
    tpu.vector_store %arg9[%c40_52, %c0_53], %91 {strides = array<i32>} : memref<72x512xf32, #tpu.memory_space<vmem>>, vector<8x512xf32>,
    %c497_i32_54 = arith.constant 497 : i32
    %93 = tpu.dynamic_rotate %58 by %c497_i32_54 dim 1 : vector<8x512xf32>, i32 -> vector<8x512xf32>
    %94 = vector.extract_strided_slice %8 {offsets = [5, 0], sizes = [1, 512], strides = [1, 1]} : vector<8x512xf32> to vector<1x512xf32>
    %95 = vector.broadcast %94 : vector<1x512xf32> to vector<8x512xf32>
    %96 = arith.mulf %93, %95 : vector<8x512xf32>
    %c48_55 = arith.constant 48 : index
    %c0_56 = arith.constant 0 : index
    %97 = vector.load %arg9[%c48_55, %c0_56] : memref<72x512xf32, #tpu.memory_space<vmem>>, vector<8x512xf32>
    tpu.vector_store %arg9[%c48_55, %c0_56], %96 {strides = array<i32>} : memref<72x512xf32, #tpu.memory_space<vmem>>, vector<8x512xf32>,
    %c496_i32_57 = arith.constant 496 : i32
    %98 = tpu.dynamic_rotate %58 by %c496_i32_57 dim 1 : vector<8x512xf32>, i32 -> vector<8x512xf32>
    %99 = vector.extract_strided_slice %8 {offsets = [6, 0], sizes = [1, 512], strides = [1, 1]} : vector<8x512xf32> to vector<1x512xf32>
    %100 = vector.broadcast %99 : vector<1x512xf32> to vector<8x512xf32>
    %101 = arith.mulf %98, %100 : vector<8x512xf32>
    %c56_58 = arith.constant 56 : index
    %c0_59 = arith.constant 0 : index
    %102 = vector.load %arg9[%c56_58, %c0_59] : memref<72x512xf32, #tpu.memory_space<vmem>>, vector<8x512xf32>
    tpu.vector_store %arg9[%c56_58, %c0_59], %101 {strides = array<i32>} : memref<72x512xf32, #tpu.memory_space<vmem>>, vector<8x512xf32>,
    %c495_i32_60 = arith.constant 495 : i32
    %103 = tpu.dynamic_rotate %58 by %c495_i32_60 dim 1 : vector<8x512xf32>, i32 -> vector<8x512xf32>
    %104 = vector.extract_strided_slice %8 {offsets = [7, 0], sizes = [1, 512], strides = [1, 1]} : vector<8x512xf32> to vector<1x512xf32>
    %105 = vector.broadcast %104 : vector<1x512xf32> to vector<8x512xf32>
    %106 = arith.mulf %103, %105 : vector<8x512xf32>
    %c64_61 = arith.constant 64 : index
    %c0_62 = arith.constant 0 : index
    %107 = vector.load %arg9[%c64_61, %c0_62] : memref<72x512xf32, #tpu.memory_space<vmem>>, vector<8x512xf32>
    tpu.vector_store %arg9[%c64_61, %c0_62], %106 {strides = array<i32>} : memref<72x512xf32, #tpu.memory_space<vmem>>, vector<8x512xf32>,
    %c0_63 = arith.constant 0 : index
    %c0_64 = arith.constant 0 : index
    %108 = vector.load %arg4[%c0_63, %c0_64] : memref<8x72xf32, #tpu.memory_space<vmem>>, vector<8x72xf32>
    %c0_65 = arith.constant 0 : index
    %c0_66 = arith.constant 0 : index
    %109 = vector.load %arg9[%c0_65, %c0_66] : memref<72x512xf32, #tpu.memory_space<vmem>>, vector<72x512xf32>
    %cst_67 = arith.constant dense<0.000000e+00> : vector<8x512xf32>
    %110 = tpu.matmul %108, %109, %cst_67 {dimension_numbers = #tpu.dot_dimension_numbers<[1], [0], [0], [1], [0, 0, 1, 1], [], []>} : vector<8x72xf32>, vector<72x512xf32>, vector<8x512xf32> -> vector<8x512xf32>
    %c0_68 = arith.constant 0 : index
    %c0_69 = arith.constant 0 : index
    %111 = vector.load %arg5[%c0_68, %c0_69] : memref<8x1xf32, #tpu.memory_space<vmem>>, vector<8x1xf32>
    %112 = vector.broadcast %111 : vector<8x1xf32> to vector<8x512xf32>
    %113 = arith.addf %110, %112 : vector<8x512xf32>
    %cst_70 = arith.constant 0.000000e+00 : f32
    %114 = vector.broadcast %cst_70 : f32 to vector<8x512xf32>
    %115 = arith.maximumf %113, %114 : vector<8x512xf32>
    %116 = vector.extract_strided_slice %115 {offsets = [0, 0], sizes = [8, 256], strides = [1, 1]} : vector<8x512xf32> to vector<8x256xf32>
    %c0_71 = arith.constant 0 : index
    %c0_72 = arith.constant 0 : index
    %c0_73 = arith.constant 0 : index
    %117 = vector.load %arg7[%c0_71, %c0_72, %c0_73] : memref<2x8x256xf32, #tpu.memory_space<vmem>>, vector<1x8x256xf32>
    %118 = vector.shape_cast %117 : vector<1x8x256xf32> to vector<8x256xf32>
    %119 = vector.shape_cast %116 : vector<8x256xf32> to vector<1x8x256xf32>
    tpu.vector_store %arg7[%c0_71, %c0_72, %c0_73], %119 {strides = array<i32>} : memref<2x8x256xf32, #tpu.memory_space<vmem>>, vector<1x8x256xf32>,
    %120 = vector.extract_strided_slice %115 {offsets = [0, 256], sizes = [8, 256], strides = [1, 1]} : vector<8x512xf32> to vector<8x256xf32>
    %c1_74 = arith.constant 1 : index
    %c0_75 = arith.constant 0 : index
    %c0_76 = arith.constant 0 : index
    %121 = vector.load %arg7[%c1_74, %c0_75, %c0_76] : memref<2x8x256xf32, #tpu.memory_space<vmem>>, vector<1x8x256xf32>
    %122 = vector.shape_cast %121 : vector<1x8x256xf32> to vector<8x256xf32>
    %123 = vector.shape_cast %120 : vector<8x256xf32> to vector<1x8x256xf32>
    tpu.vector_store %arg7[%c1_74, %c0_75, %c0_76], %123 {strides = array<i32>} : memref<2x8x256xf32, #tpu.memory_space<vmem>>, vector<1x8x256xf32>,
    return
  }
}

</mosaic_0001>

<llo_original>
// kernel: fused_forward.1
$region0: #{fused_forward.1}
  #allocation0 [shape = 'u32[]', space=smem, size = 0x4, offset = 0x4, fixed_abs, tag = 'smem constant byte address 0x4 - core index']
  #allocation1 [shape = 'u32[144,128]{1,0:T(1,128)}', space=vmem, size = 0x12000, scoped, tag = 'internal scratch']
  #allocation2 [shape = 'f32[8,512]{1,0:T(8,128)}', space=vmem, size = 0x4000, scoped, tag = 'scratch operand']
  #allocation3 [shape = 'f32[72,512]{1,0:T(8,128)}', space=vmem, size = 0x24000, scoped, tag = 'scratch operand']
  %s0 = inlined_call_operand.vmem [shape: f32[2,4,256], index: 0, kind: input, shape index: {}]
  %s1 = inlined_call_operand.vmem [shape: f32[8,512], index: 1, kind: input, shape index: {}]
  %s2 = inlined_call_operand.vmem [shape: f32[8,72], index: 2, kind: input, shape index: {}]
  %s3 = inlined_call_operand.vmem [shape: f32[8,1], index: 3, kind: input, shape index: {}]
  %s4 = inlined_call_operand.vmem [shape: f32[8,72], index: 4, kind: input, shape index: {}]
  %s5 = inlined_call_operand.vmem [shape: f32[8,1], index: 5, kind: input, shape index: {}]
  %s6 = inlined_call_operand.vmem [shape: f32[2,8,256], index: 6, kind: output, shape index: {0}]
  %s7 = inlined_call_operand.vmem [shape: f32[2,8,256], index: 7, kind: output, shape index: {1}]
  %8 = xla_tuple %s6, %s7
  %s9 = sld [smem:[#allocation0]]
  $region42: #{fused_forward.1} parent=0
    _
  %s11 = ssub.s32 1, %s9
  %s12 = scalar_select 0, %s11, %s9
  // Predicated region
  $region2: #{fused_forward.1} parent=0 // pred_check
    _
  $region3: #{fused_forward.1} parent=0 // pred_check_branch
    %14 = sbr.rel (0) target = $region5
  $region4: #{fused_forward.1} parent=0 // pred_region
    _
  $region5: #{fused_forward.1} parent=0 // pred_fallthru
    _
  // Predicated region
  $region6: #{fused_forward.1} parent=0 // pred_check
    _
  $region7: #{fused_forward.1} parent=0 // pred_check_branch
    %16 = sbr.rel (0) target = $region9
  $region8: #{fused_forward.1} parent=0 // pred_region
    _
  $region9: #{fused_forward.1} parent=0 // pred_fallthru
    _
  // Predicated region
  $region10: #{fused_forward.1} parent=0 // pred_check
    _
  $region11: #{fused_forward.1} parent=0 // pred_check_branch
    %18 = sbr.rel (0) target = $region13
  $region12: #{fused_forward.1} parent=0 // pred_region
    _
  $region13: #{fused_forward.1} parent=0 // pred_fallthru
    _
  // Predicated region
  $region14: #{fused_forward.1} parent=0 // pred_check
    _
  $region15: #{fused_forward.1} parent=0 // pred_check_branch
    %20 = sbr.rel (0) target = $region17
  $region16: #{fused_forward.1} parent=0 // pred_region
    _
  $region17: #{fused_forward.1} parent=0 // pred_fallthru
    _
  // Predicated region
  $region18: #{fused_forward.1} parent=0 // pred_check
    _
  $region19: #{fused_forward.1} parent=0 // pred_check_branch
    %22 = sbr.rel (0) target = $region21
  $region20: #{fused_forward.1} parent=0 // pred_region
    _
  $region21: #{fused_forward.1} parent=0 // pred_fallthru
    _
  // Predicated region
  $region22: #{fused_forward.1} parent=0 // pred_check
    _
  $region23: #{fused_forward.1} parent=0 // pred_check_branch
    %24 = sbr.rel (0) target = $region25
  $region24: #{fused_forward.1} parent=0 // pred_region
    _
  $region25: #{fused_forward.1} parent=0 // pred_fallthru
    _
  %25 = vst [vmem:[#allocation2] sm:$0xff] 0.0
  %26 = vst [vmem:[#allocation2 + $0x8] sm:$0xff] 0.0
  %27 = vst [vmem:[#allocation2 + $0x10] sm:$0xff] 0.0
  %28 = vst [vmem:[#allocation2 + $0x18] sm:$0xff] 0.0
  %v29 = vld [vmem:[%s0] sm:$0xff]
  %v31 = vcombine.high %v29, %v29
  %33 = vst [vmem:[#allocation2] sm:$0xf] %v29
  %34 = vst [vmem:[#allocation2 + $0x8] sm:$0xf] %v31
  %s35 = scalar_lea.vmem %s0, 8
  %v36 = vld [vmem:[%s35] sm:$0xff]
  %v38 = vcombine.high %v36, %v36
  %40 = vst [vmem:[#allocation2 + $0x10] sm:$0xf] %v36
  %41 = vst [vmem:[#allocation2 + $0x18] sm:$0xf] %v38
  %v42 = vld [vmem:[%s1] sm:$0xff]
  %v43 = vld [vmem:[%s1 + $0x8] sm:$0xff]
  %v44 = vld [vmem:[%s1 + $0x10] sm:$0xff]
  %v45 = vld [vmem:[%s1 + $0x18] sm:$0xff]
  %v46 = vld [vmem:[#allocation2] sm:$0xff]
  %v47 = vld [vmem:[#allocation2 + $0x8] sm:$0xff]
  %v48 = vld [vmem:[#allocation2 + $0x10] sm:$0xff]
  %v49 = vld [vmem:[#allocation2 + $0x18] sm:$0xff]
  %50 = vrot.lane.b32.xlu0 %v46, 17
  %v51 = vpop.permute.xlu0 %50
  %52 = vrot.lane.b32.xlu0 %v47, 17
  %v53 = vpop.permute.xlu0 %52
  %54 = vrot.lane.b32.xlu0 %v48, 17
  %v55 = vpop.permute.xlu0 %54
  %56 = vrot.lane.b32.xlu0 %v49, 17
  %v57 = vpop.permute.xlu0 %56
  %v58 = vlaneseq
  %v59 = vand.u32 %v58, 127
  %vm60 = vcmp.lt.s32.totalorder %v59, 17
  %v61 = vsel %vm60, %v55, %v57
  %v62 = vsel %vm60, %v53, %v55
  %v63 = vsel %vm60, %v51, %v53
  %v64 = vsel %vm60, %v57, %v51
  %v65 = vlaneseq
  %v66 = vshrl.u32 %v65, 7
  %v67 = vsub.s32 0, %v66
  %v68 = vrot.slane %v42, %v67
  %v69 = vlaneseq
  %v70 = vshrl.u32 %v69, 7
  %v71 = vsub.s32 0, %v70
  %v72 = vrot.slane %v43, %v71
  %v73 = vlaneseq
  %v74 = vshrl.u32 %v73, 7
  %v75 = vsub.s32 0, %v74
  %v76 = vrot.slane %v44, %v75
  %v77 = vlaneseq
  %v78 = vshrl.u32 %v77, 7
  %v79 = vsub.s32 0, %v78
  %v80 = vrot.slane %v45, %v79
  %v81 = vmul.f32 %v64, %v68
  %v82 = vmul.f32 %v63, %v72
  %v83 = vmul.f32 %v62, %v76
  %v84 = vmul.f32 %v61, %v80
  %85 = vst [vmem:[#allocation3] sm:$0xff] %v81
  %86 = vst [vmem:[#allocation3 + $0x8] sm:$0xff] %v82
  %87 = vst [vmem:[#allocation3 + $0x10] sm:$0xff] %v83
  %88 = vst [vmem:[#allocation3 + $0x18] sm:$0xff] %v84
  %89 = vrot.lane.b32.xlu0 %v46, 16
  %v90 = vpop.permute.xlu0 %89
  %91 = vrot.lane.b32.xlu0 %v47, 16
  %v92 = vpop.permute.xlu0 %91
  %93 = vrot.lane.b32.xlu0 %v48, 16
  %v94 = vpop.permute.xlu0 %93
  %95 = vrot.lane.b32.xlu0 %v49, 16
  %v96 = vpop.permute.xlu0 %95
  %vm97 = vcmp.lt.s32.totalorder %v59, 16
  %v98 = vsel %vm97, %v94, %v96
  %v99 = vsel %vm97, %v92, %v94
  %v100 = vsel %vm97, %v90, %v92
  %v101 = vsel %vm97, %v96, %v90
  %v102 = vlaneseq
  %v103 = vshrl.u32 %v102, 7
  %v104 = vsub.s32 1, %v103
  %v105 = vrot.slane %v42, %v104
  %v106 = vlaneseq
  %v107 = vshrl.u32 %v106, 7
  %v108 = vsub.s32 1, %v107
  %v109 = vrot.slane %v43, %v108
  %v110 = vlaneseq
  %v111 = vshrl.u32 %v110, 7
  %v112 = vsub.s32 1, %v111
  %v113 = vrot.slane %v44, %v112
  %v114 = vlaneseq
  %v115 = vshrl.u32 %v114, 7
  %v116 = vsub.s32 1, %v115
  %v117 = vrot.slane %v45, %v116
  %v118 = vmul.f32 %v101, %v105
  %v119 = vmul.f32 %v100, %v109
  %v120 = vmul.f32 %v99, %v113
  %v121 = vmul.f32 %v98, %v117
  %122 = vst [vmem:[#allocation3 + $0x20] sm:$0xff] %v118
  %123 = vst [vmem:[#allocation3 + $0x28] sm:$0xff] %v119
  %124 = vst [vmem:[#allocation3 + $0x30] sm:$0xff] %v120
  %125 = vst [vmem:[#allocation3 + $0x38] sm:$0xff] %v121
  %126 = vrot.lane.b32.xlu0 %v46, 15
  %v127 = vpop.permute.xlu0 %126
  %128 = vrot.lane.b32.xlu0 %v47, 15
  %v129 = vpop.permute.xlu0 %128
  %130 = vrot.lane.b32.xlu0 %v48, 15
  %v131 = vpop.permute.xlu0 %130
  %132 = vrot.lane.b32.xlu0 %v49, 15
  %v133 = vpop.permute.xlu0 %132
  %vm134 = vcmp.lt.s32.totalorder %v59, 15
  %v135 = vsel %vm134, %v131, %v133
  %v136 = vsel %vm134, %v129, %v131
  %v137 = vsel %vm134, %v127, %v129
  %v138 = vsel %vm134, %v133, %v127
  %v139 = vlaneseq
  %v140 = vshrl.u32 %v139, 7
  %v141 = vsub.s32 2, %v140
  %v142 = vrot.slane %v42, %v141
  %v143 = vlaneseq
  %v144 = vshrl.u32 %v143, 7
  %v145 = vsub.s32 2, %v144
  %v146 = vrot.slane %v43, %v145
  %v147 = vlaneseq
  %v148 = vshrl.u32 %v147, 7
  %v149 = vsub.s32 2, %v148
  %v150 = vrot.slane %v44, %v149
  %v151 = vlaneseq
  %v152 = vshrl.u32 %v151, 7
  %v153 = vsub.s32 2, %v152
  %v154 = vrot.slane %v45, %v153
  %v155 = vmul.f32 %v138, %v142
  %v156 = vmul.f32 %v137, %v146
  %v157 = vmul.f32 %v136, %v150
  %v158 = vmul.f32 %v135, %v154
  %159 = vst [vmem:[#allocation3 + $0x40] sm:$0xff] %v155
  %160 = vst [vmem:[#allocation3 + $0x48] sm:$0xff] %v156
  %161 = vst [vmem:[#allocation3 + $0x50] sm:$0xff] %v157
  %162 = vst [vmem:[#allocation3 + $0x58] sm:$0xff] %v158
  %163 = vrot.lane.b32.xlu0 %v46, 1
  %v164 = vpop.permute.xlu0 %163
  %165 = vrot.lane.b32.xlu0 %v47, 1
  %v166 = vpop.permute.xlu0 %165
  %167 = vrot.lane.b32.xlu0 %v48, 1
  %v168 = vpop.permute.xlu0 %167
  %169 = vrot.lane.b32.xlu0 %v49, 1
  %v170 = vpop.permute.xlu0 %169
  %vm171 = vcmp.lt.s32.totalorder %v59, 1
  %v172 = vsel %vm171, %v168, %v170
  %v173 = vsel %vm171, %v166, %v168
  %v174 = vsel %vm171, %v164, %v166
  %v175 = vsel %vm171, %v170, %v164
  %v176 = vlaneseq
  %v177 = vshrl.u32 %v176, 7
  %v178 = vsub.s32 3, %v177
  %v179 = vrot.slane %v42, %v178
  %v180 = vlaneseq
  %v181 = vshrl.u32 %v180, 7
  %v182 = vsub.s32 3, %v181
  %v183 = vrot.slane %v43, %v182
  %v184 = vlaneseq
  %v185 = vshrl.u32 %v184, 7
  %v186 = vsub.s32 3, %v185
  %v187 = vrot.slane %v44, %v186
  %v188 = vlaneseq
  %v189 = vshrl.u32 %v188, 7
  %v190 = vsub.s32 3, %v189
  %v191 = vrot.slane %v45, %v190
  %v192 = vmul.f32 %v175, %v179
  %v193 = vmul.f32 %v174, %v183
  %v194 = vmul.f32 %v173, %v187
  %v195 = vmul.f32 %v172, %v191
  %196 = vst [vmem:[#allocation3 + $0x60] sm:$0xff] %v192
  %197 = vst [vmem:[#allocation3 + $0x68] sm:$0xff] %v193
  %198 = vst [vmem:[#allocation3 + $0x70] sm:$0xff] %v194
  %199 = vst [vmem:[#allocation3 + $0x78] sm:$0xff] %v195
  %200 = vst [vmem:[#allocation3 + $0x80] sm:$0xff] %v46
  %201 = vst [vmem:[#allocation3 + $0x88] sm:$0xff] %v47
  %202 = vst [vmem:[#allocation3 + $0x90] sm:$0xff] %v48
  %203 = vst [vmem:[#allocation3 + $0x98] sm:$0xff] %v49
  %204 = vrot.lane.b32.xlu0 %v46, 127
  %v205 = vpop.permute.xlu0 %204
  %206 = vrot.lane.b32.xlu0 %v47, 127
  %v207 = vpop.permute.xlu0 %206
  %208 = vrot.lane.b32.xlu0 %v48, 127
  %v209 = vpop.permute.xlu0 %208
  %210 = vrot.lane.b32.xlu0 %v49, 127
  %v211 = vpop.permute.xlu0 %210
  %vm212 = vcmp.lt.s32.totalorder %v59, 127
  %v213 = vsel %vm212, %v209, %v211
  %v214 = vsel %vm212, %v207, %v209
  %v215 = vsel %vm212, %v205, %v207
  %v216 = vsel %vm212, %v211, %v205
  %v217 = vlaneseq
  %v218 = vshrl.u32 %v217, 7
  %v219 = vsub.s32 4, %v218
  %v220 = vrot.slane %v42, %v219
  %v221 = vlaneseq
  %v222 = vshrl.u32 %v221, 7
  %v223 = vsub.s32 4, %v222
  %v224 = vrot.slane %v43, %v223
  %v225 = vlaneseq
  %v226 = vshrl.u32 %v225, 7
  %v227 = vsub.s32 4, %v226
  %v228 = vrot.slane %v44, %v227
  %v229 = vlaneseq
  %v230 = vshrl.u32 %v229, 7
  %v231 = vsub.s32 4, %v230
  %v232 = vrot.slane %v45, %v231
  %v233 = vmul.f32 %v215, %v220
  %v234 = vmul.f32 %v214, %v224
  %v235 = vmul.f32 %v213, %v228
  %v236 = vmul.f32 %v216, %v232
  %237 = vst [vmem:[#allocation3 + $0xa0] sm:$0xff] %v233
  %238 = vst [vmem:[#allocation3 + $0xa8] sm:$0xff] %v234
  %239 = vst [vmem:[#allocation3 + $0xb0] sm:$0xff] %v235
  %240 = vst [vmem:[#allocation3 + $0xb8] sm:$0xff] %v236
  %241 = vrot.lane.b32.xlu0 %v46, 113
  %v242 = vpop.permute.xlu0 %241
  %243 = vrot.lane.b32.xlu0 %v47, 113
  %v244 = vpop.permute.xlu0 %243
  %245 = vrot.lane.b32.xlu0 %v48, 113
  %v246 = vpop.permute.xlu0 %245
  %247 = vrot.lane.b32.xlu0 %v49, 113
  %v248 = vpop.permute.xlu0 %247
  %vm249 = vcmp.lt.s32.totalorder %v59, 113
  %v250 = vsel %vm249, %v246, %v248
  %v251 = vsel %vm249, %v244, %v246
  %v252 = vsel %vm249, %v242, %v244
  %v253 = vsel %vm249, %v248, %v242
  %v254 = vlaneseq
  %v255 = vshrl.u32 %v254, 7
  %v256 = vsub.s32 5, %v255
  %v257 = vrot.slane %v42, %v256
  %v258 = vlaneseq
  %v259 = vshrl.u32 %v258, 7
  %v260 = vsub.s32 5, %v259
  %v261 = vrot.slane %v43, %v260
  %v262 = vlaneseq
  %v263 = vshrl.u32 %v262, 7
  %v264 = vsub.s32 5, %v263
  %v265 = vrot.slane %v44, %v264
  %v266 = vlaneseq
  %v267 = vshrl.u32 %v266, 7
  %v268 = vsub.s32 5, %v267
  %v269 = vrot.slane %v45, %v268
  %v270 = vmul.f32 %v252, %v257
  %v271 = vmul.f32 %v251, %v261
  %v272 = vmul.f32 %v250, %v265
  %v273 = vmul.f32 %v253, %v269
  %274 = vst [vmem:[#allocation3 + $0xc0] sm:$0xff] %v270
  %275 = vst [vmem:[#allocation3 + $0xc8] sm:$0xff] %v271
  %276 = vst [vmem:[#allocation3 + $0xd0] sm:$0xff] %v272
  %277 = vst [vmem:[#allocation3 + $0xd8] sm:$0xff] %v273
  %278 = vrot.lane.b32.xlu0 %v46, 112
  %v279 = vpop.permute.xlu0 %278
  %280 = vrot.lane.b32.xlu0 %v47, 112
  %v281 = vpop.permute.xlu0 %280
  %282 = vrot.lane.b32.xlu0 %v48, 112
  %v283 = vpop.permute.xlu0 %282
  %284 = vrot.lane.b32.xlu0 %v49, 112
  %v285 = vpop.permute.xlu0 %284
  %vm286 = vcmp.lt.s32.totalorder %v59, 112
  %v287 = vsel %vm286, %v283, %v285
  %v288 = vsel %vm286, %v281, %v283
  %v289 = vsel %vm286, %v279, %v281
  %v290 = vsel %vm286, %v285, %v279
  %v291 = vlaneseq
  %v292 = vshrl.u32 %v291, 7
  %v293 = vsub.s32 6, %v292
  %v294 = vrot.slane %v42, %v293
  %v295 = vlaneseq
  %v296 = vshrl.u32 %v295, 7
  %v297 = vsub.s32 6, %v296
  %v298 = vrot.slane %v43, %v297
  %v299 = vlaneseq
  %v300 = vshrl.u32 %v299, 7
  %v301 = vsub.s32 6, %v300
  %v302 = vrot.slane %v44, %v301
  %v303 = vlaneseq
  %v304 = vshrl.u32 %v303, 7
  %v305 = vsub.s32 6, %v304
  %v306 = vrot.slane %v45, %v305
  %v307 = vmul.f32 %v289, %v294
  %v308 = vmul.f32 %v288, %v298
  %v309 = vmul.f32 %v287, %v302
  %v310 = vmul.f32 %v290, %v306
  %311 = vst [vmem:[#allocation3 + $0xe0] sm:$0xff] %v307
  %312 = vst [vmem:[#allocation3 + $0xe8] sm:$0xff] %v308
  %313 = vst [vmem:[#allocation3 + $0xf0] sm:$0xff] %v309
  %314 = vst [vmem:[#allocation3 + $0xf8] sm:$0xff] %v310
  %315 = vrot.lane.b32.xlu0 %v46, 111
  %v316 = vpop.permute.xlu0 %315
  %317 = vrot.lane.b32.xlu0 %v47, 111
  %v318 = vpop.permute.xlu0 %317
  %319 = vrot.lane.b32.xlu0 %v48, 111
  %v320 = vpop.permute.xlu0 %319
  %321 = vrot.lane.b32.xlu0 %v49, 111
  %v322 = vpop.permute.xlu0 %321
  %vm323 = vcmp.lt.s32.totalorder %v59, 111
  %v324 = vsel %vm323, %v320, %v322
  %v325 = vsel %vm323, %v318, %v320
  %v326 = vsel %vm323, %v316, %v318
  %v327 = vsel %vm323, %v322, %v316
  %v328 = vlaneseq
  %v329 = vshrl.u32 %v328, 7
  %v330 = vsub.s32 7, %v329
  %v331 = vrot.slane %v42, %v330
  %v332 = vlaneseq
  %v333 = vshrl.u32 %v332, 7
  %v334 = vsub.s32 7, %v333
  %v335 = vrot.slane %v43, %v334
  %v336 = vlaneseq
  %v337 = vshrl.u32 %v336, 7
  %v338 = vsub.s32 7, %v337
  %v339 = vrot.slane %v44, %v338
  %v340 = vlaneseq
  %v341 = vshrl.u32 %v340, 7
  %v342 = vsub.s32 7, %v341
  %v343 = vrot.slane %v45, %v342
  %v344 = vmul.f32 %v326, %v331
  %v345 = vmul.f32 %v325, %v335
  %v346 = vmul.f32 %v324, %v339
  %v347 = vmul.f32 %v327, %v343
  %348 = vst [vmem:[#allocation3 + $0x100] sm:$0xff] %v344
  %349 = vst [vmem:[#allocation3 + $0x108] sm:$0xff] %v345
  %350 = vst [vmem:[#allocation3 + $0x110] sm:$0xff] %v346
  %351 = vst [vmem:[#allocation3 + $0x118] sm:$0xff] %v347
  %v352 = vld [vmem:[%s2] sm:$0xff]
  %v353 = vld [vmem:[#allocation3] sm:$0xff]
  %v354 = vld [vmem:[#allocation3 + $0x8] sm:$0xff]
  %v355 = vld [vmem:[#allocation3 + $0x10] sm:$0xff]
  %v356 = vld [vmem:[#allocation3 + $0x18] sm:$0xff]
  %v357 = vld [vmem:[#allocation3 + $0x20] sm:$0xff]
  %v358 = vld [vmem:[#allocation3 + $0x28] sm:$0xff]
  %v359 = vld [vmem:[#allocation3 + $0x30] sm:$0xff]
  %v360 = vld [vmem:[#allocation3 + $0x38] sm:$0xff]
  %v361 = vld [vmem:[#allocation3 + $0x40] sm:$0xff]
  %v362 = vld [vmem:[#allocation3 + $0x48] sm:$0xff]
  %v363 = vld [vmem:[#allocation3 + $0x50] sm:$0xff]
  %v364 = vld [vmem:[#allocation3 + $0x58] sm:$0xff]
  %v365 = vld [vmem:[#allocation3 + $0x60] sm:$0xff]
  %v366 = vld [vmem:[#allocation3 + $0x68] sm:$0xff]
  %v367 = vld [vmem:[#allocation3 + $0x70] sm:$0xff]
  %v368 = vld [vmem:[#allocation3 + $0x78] sm:$0xff]
  %v369 = vld [vmem:[#allocation3 + $0x80] sm:$0xff]
  %v370 = vld [vmem:[#allocation3 + $0x88] sm:$0xff]
  %v371 = vld [vmem:[#allocation3 + $0x90] sm:$0xff]
  %v372 = vld [vmem:[#allocation3 + $0x98] sm:$0xff]
  %v373 = vld [vmem:[#allocation3 + $0xa0] sm:$0xff]
  %v374 = vld [vmem:[#allocation3 + $0xa8] sm:$0xff]
  %v375 = vld [vmem:[#allocation3 + $0xb0] sm:$0xff]
  %v376 = vld [vmem:[#allocation3 + $0xb8] sm:$0xff]
  %v377 = vld [vmem:[#allocation3 + $0xc0] sm:$0xff]
  %v378 = vld [vmem:[#allocation3 + $0xc8] sm:$0xff]
  %v379 = vld [vmem:[#allocation3 + $0xd0] sm:$0xff]
  %v380 = vld [vmem:[#allocation3 + $0xd8] sm:$0xff]
  %v381 = vld [vmem:[#allocation3 + $0xe0] sm:$0xff]
  %v382 = vld [vmem:[#allocation3 + $0xe8] sm:$0xff]
  %v383 = vld [vmem:[#allocation3 + $0xf0] sm:$0xff]
  %v384 = vld [vmem:[#allocation3 + $0xf8] sm:$0xff]
  %v385 = vld [vmem:[#allocation3 + $0x100] sm:$0xff]
  %v386 = vld [vmem:[#allocation3 + $0x108] sm:$0xff]
  %v387 = vld [vmem:[#allocation3 + $0x110] sm:$0xff]
  %v388 = vld [vmem:[#allocation3 + $0x118] sm:$0xff]
  %v389 = vld [vmem:[%s3] sm:$0xff]
  %391 = vset.pattern.permute.xlu0 0
  %392 = vperm.xlu0 %391, %v389
  %v393 = vpop.permute.xlu0 %392
  %vm395 = vcmask 588800
  %v397 = vsel %vm395, %v352, 0
  %399 = vmatprep.subr.mxu0 %v354
  %400 = vmatpush1.msra.mxu0 %v353
  %401 = vmatprep.subr.mxu0 %v358
  %402 = vmatpush1.msra.mxu0 %v357
  %403 = vmatprep.subr.mxu0 %v362
  %404 = vmatpush1.msra.mxu0 %v361
  %405 = vmatprep.subr.mxu0 %v366
  %406 = vmatpush1.msra.mxu0 %v365
  %407 = vmatprep.subr.mxu0 %v370
  %408 = vmatpush1.msra.mxu0 %v369
  %409 = vmatprep.subr.mxu0 %v374
  %410 = vmatpush1.msra.mxu0 %v373
  %411 = vmatprep.subr.mxu0 %v378
  %412 = vmatpush1.msra.mxu0 %v377
  %413 = vmatprep.subr.mxu0 %v382
  %414 = vmatpush1.msra.mxu0 %v381
  %415 = vmatprep.subr.mxu0 %v386
  %416 = vmatpush1.msra.mxu0 %v385
  %417 = vmatprep.subr.mxu0 0.0
  %418 = vmatpush1.msra.mxu0 0.0
  %419 = vmatprep.subr.mxu0 0.0
  %420 = vmatpush1.msra.mxu0 0.0
  %421 = vmatprep.subr.mxu0 0.0
  %422 = vmatpush1.msra.mxu0 0.0
  %423 = vmatprep.subr.mxu0 0.0
  %424 = vmatpush1.msra.mxu0 0.0
  %425 = vmatprep.subr.mxu0 0.0
  %426 = vmatpush1.msra.mxu0 0.0
  %427 = vmatprep.subr.mxu0 0.0
  %428 = vmatpush1.msra.mxu0 0.0
  %429 = vmatprep.subr.mxu0 0.0
  %430 = vmatpush1.msra.mxu0 0.0
  %431 = vmatprep.subr.mxu0 0.0
  %432 = vmatpush1.msra.mxu0 0.0
  %433 = vmatprep.subr.mxu0 0.0
  %434 = vmatpush1.msra.mxu0 0.0
  %435 = vmatprep.subr.mxu0 0.0
  %436 = vmatpush1.msra.mxu0 0.0
  %437 = vmatprep.subr.mxu0 0.0
  %438 = vmatpush1.msra.mxu0 0.0
  %439 = vmatprep.subr.mxu0 0.0
  %440 = vmatpush1.msra.mxu0 0.0
  %441 = vmatprep.subr.mxu0 0.0
  %442 = vmatpush1.msra.mxu0 0.0
  %443 = vmatprep.subr.mxu0 0.0
  %444 = vmatpush1.msra.mxu0 0.0
  %445 = vmatprep.subr.mxu0 0.0
  %446 = vmatpush1.msra.mxu0 0.0
  %447 = vmatprep.subr.mxu0 0.0
  %448 = vmatpush1.msra.mxu0 0.0
  %449 = vmatprep.subr.mxu0 0.0
  %450 = vmatpush1.msra.mxu0 0.0
  %451 = vmatprep.subr.mxu0 0.0
  %452 = vmatpush1.msra.mxu0 0.0
  %453 = vmatprep.subr.mxu0 0.0
  %454 = vmatpush1.msra.mxu0 0.0
  %455 = vmatprep.subr.mxu0 0.0
  %456 = vmatpush1.msra.mxu0 0.0
  %457 = vmatprep.subr.mxu0 0.0
  %458 = vmatpush1.msra.mxu0 0.0
  %459 = vmatprep.subr.mxu0 0.0
  %460 = vmatpush1.msra.mxu0 0.0
  %461 = vmatprep.subr.mxu0 0.0
  %462 = vmatpush1.msra.mxu0 0.0
  %463 = vmatprep.mubr.f32.mxu0 0.0
  %464 = vmatmul.mubr.f32.gmra.mrb[0].mxu0 %v397
  %v465 = vpop.f32.mrb[0].mxu0
  %v466 = vadd.f32 %v393, %v465
  %v467 = vpop.f32.mrb[0].mxu0
  %v468 = vadd.f32 %v393, %v467
  %469 = vdwg.mxu0
  %470 = vmatprep.subr.mxu0 %v356
  %471 = vmatpush1.msra.mxu0 %v355
  %472 = vmatprep.subr.mxu0 %v360
  %473 = vmatpush1.msra.mxu0 %v359
  %474 = vmatprep.subr.mxu0 %v364
  %475 = vmatpush1.msra.mxu0 %v363
  %476 = vmatprep.subr.mxu0 %v368
  %477 = vmatpush1.msra.mxu0 %v367
  %478 = vmatprep.subr.mxu0 %v372
  %479 = vmatpush1.msra.mxu0 %v371
  %480 = vmatprep.subr.mxu0 %v376
  %481 = vmatpush1.msra.mxu0 %v375
  %482 = vmatprep.subr.mxu0 %v380
  %483 = vmatpush1.msra.mxu0 %v379
  %484 = vmatprep.subr.mxu0 %v384
  %485 = vmatpush1.msra.mxu0 %v383
  %486 = vmatprep.subr.mxu0 %v388
  %487 = vmatpush1.msra.mxu0 %v387
  %488 = vmatprep.subr.mxu0 0.0
  %489 = vmatpush1.msra.mxu0 0.0
  %490 = vmatprep.subr.mxu0 0.0
  %491 = vmatpush1.msra.mxu0 0.0
  %492 = vmatprep.subr.mxu0 0.0
  %493 = vmatpush1.msra.mxu0 0.0
  %494 = vmatprep.subr.mxu0 0.0
  %495 = vmatpush1.msra.mxu0 0.0
  %496 = vmatprep.subr.mxu0 0.0
  %497 = vmatpush1.msra.mxu0 0.0
  %498 = vmatprep.subr.mxu0 0.0
  %499 = vmatpush1.msra.mxu0 0.0
  %500 = vmatprep.subr.mxu0 0.0
  %501 = vmatpush1.msra.mxu0 0.0
  %502 = vmatprep.subr.mxu0 0.0
  %503 = vmatpush1.msra.mxu0 0.0
  %504 = vmatprep.subr.mxu0 0.0
  %505 = vmatpush1.msra.mxu0 0.0
  %506 = vmatprep.subr.mxu0 0.0
  %507 = vmatpush1.msra.mxu0 0.0
  %508 = vmatprep.subr.mxu0 0.0
  %509 = vmatpush1.msra.mxu0 0.0
  %510 = vmatprep.subr.mxu0 0.0
  %511 = vmatpush1.msra.mxu0 0.0
  %512 = vmatprep.subr.mxu0 0.0
  %513 = vmatpush1.msra.mxu0 0.0
  %514 = vmatprep.subr.mxu0 0.0
  %515 = vmatpush1.msra.mxu0 0.0
  %516 = vmatprep.subr.mxu0 0.0
  %517 = vmatpush1.msra.mxu0 0.0
  %518 = vmatprep.subr.mxu0 0.0
  %519 = vmatpush1.msra.mxu0 0.0
  %520 = vmatprep.subr.mxu0 0.0
  %521 = vmatpush1.msra.mxu0 0.0
  %522 = vmatprep.subr.mxu0 0.0
  %523 = vmatpush1.msra.mxu0 0.0
  %524 = vmatprep.subr.mxu0 0.0
  %525 = vmatpush1.msra.mxu0 0.0
  %526 = vmatprep.subr.mxu0 0.0
  %527 = vmatpush1.msra.mxu0 0.0
  %528 = vmatprep.subr.mxu0 0.0
  %529 = vmatpush1.msra.mxu0 0.0
  %530 = vmatprep.subr.mxu0 0.0
  %531 = vmatpush1.msra.mxu0 0.0
  %532 = vmatprep.subr.mxu0 0.0
  %533 = vmatpush1.msra.mxu0 0.0
  %534 = vmatprep.mubr.f32.mxu0 0.0
  %535 = vmatmul.mubr.f32.gmra.mrb[0].mxu0 %v397
  %v536 = vpop.f32.mrb[0].mxu0
  %v537 = vadd.f32 %v393, %v536
  %v538 = vpop.f32.mrb[0].mxu0
  %v539 = vadd.f32 %v393, %v538
  %540 = vdwg.mxu0
  %v541 = vmax.f32 %v466, 0.0
  %v542 = vmax.f32 %v468, 0.0
  %v543 = vmax.f32 %v537, 0.0
  %v544 = vmax.f32 %v539, 0.0
  %545 = vst [vmem:[%s6] sm:$0xff] %v541
  %546 = vst [vmem:[%s6 + $0x8] sm:$0xff] %v542
  %s547 = scalar_lea.vmem %s6, 16
  %548 = vst [vmem:[%s547] sm:$0xff] %v543
  %549 = vst [vmem:[%s547 + $0x8] sm:$0xff] %v544
  %550 = vrot.lane.b32.xlu0 %v541, 17
  %v551 = vpop.permute.xlu0 %550
  %552 = vrot.lane.b32.xlu0 %v542, 17
  %v553 = vpop.permute.xlu0 %552
  %554 = vrot.lane.b32.xlu0 %v543, 17
  %v555 = vpop.permute.xlu0 %554
  %556 = vrot.lane.b32.xlu0 %v544, 17
  %v557 = vpop.permute.xlu0 %556
  %v558 = vsel %vm60, %v555, %v557
  %v559 = vsel %vm60, %v553, %v555
  %v560 = vsel %vm60, %v551, %v553
  %v561 = vsel %vm60, %v557, %v551
  %v562 = vmul.f32 %v561, %v68
  %v563 = vmul.f32 %v560, %v72
  %v564 = vmul.f32 %v559, %v76
  %v565 = vmul.f32 %v558, %v80
  %566 = vst [vmem:[#allocation3] sm:$0xff] %v562
  %567 = vst [vmem:[#allocation3 + $0x8] sm:$0xff] %v563
  %568 = vst [vmem:[#allocation3 + $0x10] sm:$0xff] %v564
  %569 = vst [vmem:[#allocation3 + $0x18] sm:$0xff] %v565
  %570 = vrot.lane.b32.xlu0 %v541, 16
  %v571 = vpop.permute.xlu0 %570
  %572 = vrot.lane.b32.xlu0 %v542, 16
  %v573 = vpop.permute.xlu0 %572
  %574 = vrot.lane.b32.xlu0 %v543, 16
  %v575 = vpop.permute.xlu0 %574
  %576 = vrot.lane.b32.xlu0 %v544, 16
  %v577 = vpop.permute.xlu0 %576
  %v578 = vsel %vm97, %v575, %v577
  %v579 = vsel %vm97, %v573, %v575
  %v580 = vsel %vm97, %v571, %v573
  %v581 = vsel %vm97, %v577, %v571
  %v582 = vmul.f32 %v581, %v105
  %v583 = vmul.f32 %v580, %v109
  %v584 = vmul.f32 %v579, %v113
  %v585 = vmul.f32 %v578, %v117
  %586 = vst [vmem:[#allocation3 + $0x20] sm:$0xff] %v582
  %587 = vst [vmem:[#allocation3 + $0x28] sm:$0xff] %v583
  %588 = vst [vmem:[#allocation3 + $0x30] sm:$0xff] %v584
  %589 = vst [vmem:[#allocation3 + $0x38] sm:$0xff] %v585
  %590 = vrot.lane.b32.xlu0 %v541, 15
  %v591 = vpop.permute.xlu0 %590
  %592 = vrot.lane.b32.xlu0 %v542, 15
  %v593 = vpop.permute.xlu0 %592
  %594 = vrot.lane.b32.xlu0 %v543, 15
  %v595 = vpop.permute.xlu0 %594
  %596 = vrot.lane.b32.xlu0 %v544, 15
  %v597 = vpop.permute.xlu0 %596
  %v598 = vsel %vm134, %v595, %v597
  %v599 = vsel %vm134, %v593, %v595
  %v600 = vsel %vm134, %v591, %v593
  %v601 = vsel %vm134, %v597, %v591
  %v602 = vmul.f32 %v601, %v142
  %v603 = vmul.f32 %v600, %v146
  %v604 = vmul.f32 %v599, %v150
  %v605 = vmul.f32 %v598, %v154
  %606 = vst [vmem:[#allocation3 + $0x40] sm:$0xff] %v602
  %607 = vst [vmem:[#allocation3 + $0x48] sm:$0xff] %v603
  %608 = vst [vmem:[#allocation3 + $0x50] sm:$0xff] %v604
  %609 = vst [vmem:[#allocation3 + $0x58] sm:$0xff] %v605
  %610 = vrot.lane.b32.xlu0 %v541, 1
  %v611 = vpop.permute.xlu0 %610
  %612 = vrot.lane.b32.xlu0 %v542, 1
  %v613 = vpop.permute.xlu0 %612
  %614 = vrot.lane.b32.xlu0 %v543, 1
  %v615 = vpop.permute.xlu0 %614
  %616 = vrot.lane.b32.xlu0 %v544, 1
  %v617 = vpop.permute.xlu0 %616
  %v618 = vsel %vm171, %v615, %v617
  %v619 = vsel %vm171, %v613, %v615
  %v620 = vsel %vm171, %v611, %v613
  %v621 = vsel %vm171, %v617, %v611
  %v622 = vmul.f32 %v621, %v179
  %v623 = vmul.f32 %v620, %v183
  %v624 = vmul.f32 %v619, %v187
  %v625 = vmul.f32 %v618, %v191
  %626 = vst [vmem:[#allocation3 + $0x60] sm:$0xff] %v622
  %627 = vst [vmem:[#allocation3 + $0x68] sm:$0xff] %v623
  %628 = vst [vmem:[#allocation3 + $0x70] sm:$0xff] %v624
  %629 = vst [vmem:[#allocation3 + $0x78] sm:$0xff] %v625
  %630 = vst [vmem:[#allocation3 + $0x80] sm:$0xff] %v541
  %631 = vst [vmem:[#allocation3 + $0x88] sm:$0xff] %v542
  %632 = vst [vmem:[#allocation3 + $0x90] sm:$0xff] %v543
  %633 = vst [vmem:[#allocation3 + $0x98] sm:$0xff] %v544
  %634 = vrot.lane.b32.xlu0 %v541, 127
  %v635 = vpop.permute.xlu0 %634
  %636 = vrot.lane.b32.xlu0 %v542, 127
  %v637 = vpop.permute.xlu0 %636
  %638 = vrot.lane.b32.xlu0 %v543, 127
  %v639 = vpop.permute.xlu0 %638
  %640 = vrot.lane.b32.xlu0 %v544, 127
  %v641 = vpop.permute.xlu0 %640
  %v642 = vsel %vm212, %v639, %v641
  %v643 = vsel %vm212, %v637, %v639
  %v644 = vsel %vm212, %v635, %v637
  %v645 = vsel %vm212, %v641, %v635
  %v646 = vmul.f32 %v644, %v220
  %v647 = vmul.f32 %v643, %v224
  %v648 = vmul.f32 %v642, %v228
  %v649 = vmul.f32 %v645, %v232
  %650 = vst [vmem:[#allocation3 + $0xa0] sm:$0xff] %v646
  %651 = vst [vmem:[#allocation3 + $0xa8] sm:$0xff] %v647
  %652 = vst [vmem:[#allocation3 + $0xb0] sm:$0xff] %v648
  %653 = vst [vmem:[#allocation3 + $0xb8] sm:$0xff] %v649
  %654 = vrot.lane.b32.xlu0 %v541, 113
  %v655 = vpop.permute.xlu0 %654
  %656 = vrot.lane.b32.xlu0 %v542, 113
  %v657 = vpop.permute.xlu0 %656
  %658 = vrot.lane.b32.xlu0 %v543, 113
  %v659 = vpop.permute.xlu0 %658
  %660 = vrot.lane.b32.xlu0 %v544, 113
  %v661 = vpop.permute.xlu0 %660
  %v662 = vsel %vm249, %v659, %v661
  %v663 = vsel %vm249, %v657, %v659
  %v664 = vsel %vm249, %v655, %v657
  %v665 = vsel %vm249, %v661, %v655
  %v666 = vmul.f32 %v664, %v257
  %v667 = vmul.f32 %v663, %v261
  %v668 = vmul.f32 %v662, %v265
  %v669 = vmul.f32 %v665, %v269
  %670 = vst [vmem:[#allocation3 + $0xc0] sm:$0xff] %v666
  %671 = vst [vmem:[#allocation3 + $0xc8] sm:$0xff] %v667
  %672 = vst [vmem:[#allocation3 + $0xd0] sm:$0xff] %v668
  %673 = vst [vmem:[#allocation3 + $0xd8] sm:$0xff] %v669
  %674 = vrot.lane.b32.xlu0 %v541, 112
  %v675 = vpop.permute.xlu0 %674
  %676 = vrot.lane.b32.xlu0 %v542, 112
  %v677 = vpop.permute.xlu0 %676
  %678 = vrot.lane.b32.xlu0 %v543, 112
  %v679 = vpop.permute.xlu0 %678
  %680 = vrot.lane.b32.xlu0 %v544, 112
  %v681 = vpop.permute.xlu0 %680
  %v682 = vsel %vm286, %v679, %v681
  %v683 = vsel %vm286, %v677, %v679
  %v684 = vsel %vm286, %v675, %v677
  %v685 = vsel %vm286, %v681, %v675
  %v686 = vmul.f32 %v684, %v294
  %v687 = vmul.f32 %v683, %v298
  %v688 = vmul.f32 %v682, %v302
  %v689 = vmul.f32 %v685, %v306
  %690 = vst [vmem:[#allocation3 + $0xe0] sm:$0xff] %v686
  %691 = vst [vmem:[#allocation3 + $0xe8] sm:$0xff] %v687
  %692 = vst [vmem:[#allocation3 + $0xf0] sm:$0xff] %v688
  %693 = vst [vmem:[#allocation3 + $0xf8] sm:$0xff] %v689
  %694 = vrot.lane.b32.xlu0 %v541, 111
  %v695 = vpop.permute.xlu0 %694
  %696 = vrot.lane.b32.xlu0 %v542, 111
  %v697 = vpop.permute.xlu0 %696
  %698 = vrot.lane.b32.xlu0 %v543, 111
  %v699 = vpop.permute.xlu0 %698
  %700 = vrot.lane.b32.xlu0 %v544, 111
  %v701 = vpop.permute.xlu0 %700
  %v702 = vsel %vm323, %v699, %v701
  %v703 = vsel %vm323, %v697, %v699
  %v704 = vsel %vm323, %v695, %v697
  %v705 = vsel %vm323, %v701, %v695
  %v706 = vmul.f32 %v704, %v331
  %v707 = vmul.f32 %v703, %v335
  %v708 = vmul.f32 %v702, %v339
  %v709 = vmul.f32 %v705, %v343
  %710 = vst [vmem:[#allocation3 + $0x100] sm:$0xff] %v706
  %711 = vst [vmem:[#allocation3 + $0x108] sm:$0xff] %v707
  %712 = vst [vmem:[#allocation3 + $0x110] sm:$0xff] %v708
  %713 = vst [vmem:[#allocation3 + $0x118] sm:$0xff] %v709
  %v714 = vld [vmem:[%s4] sm:$0xff]
  %v715 = vld [vmem:[#allocation3] sm:$0xff]
  %v716 = vld [vmem:[#allocation3 + $0x8] sm:$0xff]
  %v717 = vld [vmem:[#allocation3 + $0x10] sm:$0xff]
  %v718 = vld [vmem:[#allocation3 + $0x18] sm:$0xff]
  %v719 = vld [vmem:[#allocation3 + $0x20] sm:$0xff]
  %v720 = vld [vmem:[#allocation3 + $0x28] sm:$0xff]
  %v721 = vld [vmem:[#allocation3 + $0x30] sm:$0xff]
  %v722 = vld [vmem:[#allocation3 + $0x38] sm:$0xff]
  %v723 = vld [vmem:[#allocation3 + $0x40] sm:$0xff]
  %v724 = vld [vmem:[#allocation3 + $0x48] sm:$0xff]
  %v725 = vld [vmem:[#allocation3 + $0x50] sm:$0xff]
  %v726 = vld [vmem:[#allocation3 + $0x58] sm:$0xff]
  %v727 = vld [vmem:[#allocation3 + $0x60] sm:$0xff]
  %v728 = vld [vmem:[#allocation3 + $0x68] sm:$0xff]
  %v729 = vld [vmem:[#allocation3 + $0x70] sm:$0xff]
  %v730 = vld [vmem:[#allocation3 + $0x78] sm:$0xff]
  %v731 = vld [vmem:[#allocation3 + $0x80] sm:$0xff]
  %v732 = vld [vmem:[#allocation3 + $0x88] sm:$0xff]
  %v733 = vld [vmem:[#allocation3 + $0x90] sm:$0xff]
  %v734 = vld [vmem:[#allocation3 + $0x98] sm:$0xff]
  %v735 = vld [vmem:[#allocation3 + $0xa0] sm:$0xff]
  %v736 = vld [vmem:[#allocation3 + $0xa8] sm:$0xff]
  %v737 = vld [vmem:[#allocation3 + $0xb0] sm:$0xff]
  %v738 = vld [vmem:[#allocation3 + $0xb8] sm:$0xff]
  %v739 = vld [vmem:[#allocation3 + $0xc0] sm:$0xff]
  %v740 = vld [vmem:[#allocation3 + $0xc8] sm:$0xff]
  %v741 = vld [vmem:[#allocation3 + $0xd0] sm:$0xff]
  %v742 = vld [vmem:[#allocation3 + $0xd8] sm:$0xff]
  %v743 = vld [vmem:[#allocation3 + $0xe0] sm:$0xff]
  %v744 = vld [vmem:[#allocation3 + $0xe8] sm:$0xff]
  %v745 = vld [vmem:[#allocation3 + $0xf0] sm:$0xff]
  %v746 = vld [vmem:[#allocation3 + $0xf8] sm:$0xff]
  %v747 = vld [vmem:[#allocation3 + $0x100] sm:$0xff]
  %v748 = vld [vmem:[#allocation3 + $0x108] sm:$0xff]
  %v749 = vld [vmem:[#allocation3 + $0x110] sm:$0xff]
  %v750 = vld [vmem:[#allocation3 + $0x118] sm:$0xff]
  %v751 = vld [vmem:[%s5] sm:$0xff]
  %753 = vset.pattern.permute.xlu0 0
  %754 = vperm.xlu0 %753, %v751
  %v755 = vpop.permute.xlu0 %754
  %v758 = vsel %vm395, %v714, 0
  %760 = vmatprep.subr.mxu0 %v716
  %761 = vmatpush1.msra.mxu0 %v715
  %762 = vmatprep.subr.mxu0 %v720
  %763 = vmatpush1.msra.mxu0 %v719
  %764 = vmatprep.subr.mxu0 %v724
  %765 = vmatpush1.msra.mxu0 %v723
  %766 = vmatprep.subr.mxu0 %v728
  %767 = vmatpush1.msra.mxu0 %v727
  %768 = vmatprep.subr.mxu0 %v732
  %769 = vmatpush1.msra.mxu0 %v731
  %770 = vmatprep.subr.mxu0 %v736
  %771 = vmatpush1.msra.mxu0 %v735
  %772 = vmatprep.subr.mxu0 %v740
  %773 = vmatpush1.msra.mxu0 %v739
  %774 = vmatprep.subr.mxu0 %v744
  %775 = vmatpush1.msra.mxu0 %v743
  %776 = vmatprep.subr.mxu0 %v748
  %777 = vmatpush1.msra.mxu0 %v747
  %778 = vmatprep.subr.mxu0 0.0
  %779 = vmatpush1.msra.mxu0 0.0
  %780 = vmatprep.subr.mxu0 0.0
  %781 = vmatpush1.msra.mxu0 0.0
  %782 = vmatprep.subr.mxu0 0.0
  %783 = vmatpush1.msra.mxu0 0.0
  %784 = vmatprep.subr.mxu0 0.0
  %785 = vmatpush1.msra.mxu0 0.0
  %786 = vmatprep.subr.mxu0 0.0
  %787 = vmatpush1.msra.mxu0 0.0
  %788 = vmatprep.subr.mxu0 0.0
  %789 = vmatpush1.msra.mxu0 0.0
  %790 = vmatprep.subr.mxu0 0.0
  %791 = vmatpush1.msra.mxu0 0.0
  %792 = vmatprep.subr.mxu0 0.0
  %793 = vmatpush1.msra.mxu0 0.0
  %794 = vmatprep.subr.mxu0 0.0
  %795 = vmatpush1.msra.mxu0 0.0
  %796 = vmatprep.subr.mxu0 0.0
  %797 = vmatpush1.msra.mxu0 0.0
  %798 = vmatprep.subr.mxu0 0.0
  %799 = vmatpush1.msra.mxu0 0.0
  %800 = vmatprep.subr.mxu0 0.0
  %801 = vmatpush1.msra.mxu0 0.0
  %802 = vmatprep.subr.mxu0 0.0
  %803 = vmatpush1.msra.mxu0 0.0
  %804 = vmatprep.subr.mxu0 0.0
  %805 = vmatpush1.msra.mxu0 0.0
  %806 = vmatprep.subr.mxu0 0.0
  %807 = vmatpush1.msra.mxu0 0.0
  %808 = vmatprep.subr.mxu0 0.0
  %809 = vmatpush1.msra.mxu0 0.0
  %810 = vmatprep.subr.mxu0 0.0
  %811 = vmatpush1.msra.mxu0 0.0
  %812 = vmatprep.subr.mxu0 0.0
  %813 = vmatpush1.msra.mxu0 0.0
  %814 = vmatprep.subr.mxu0 0.0
  %815 = vmatpush1.msra.mxu0 0.0
  %816 = vmatprep.subr.mxu0 0.0
  %817 = vmatpush1.msra.mxu0 0.0
  %818 = vmatprep.subr.mxu0 0.0
  %819 = vmatpush1.msra.mxu0 0.0
  %820 = vmatprep.subr.mxu0 0.0
  %821 = vmatpush1.msra.mxu0 0.0
  %822 = vmatprep.subr.mxu0 0.0
  %823 = vmatpush1.msra.mxu0 0.0
  %824 = vmatprep.mubr.f32.mxu0 0.0
  %825 = vmatmul.mubr.f32.gmra.mrb[0].mxu0 %v758
  %v826 = vpop.f32.mrb[0].mxu0
  %v827 = vadd.f32 %v755, %v826
  %v828 = vpop.f32.mrb[0].mxu0
  %v829 = vadd.f32 %v755, %v828
  %830 = vdwg.mxu0
  %831 = vmatprep.subr.mxu0 %v718
  %832 = vmatpush1.msra.mxu0 %v717
  %833 = vmatprep.subr.mxu0 %v722
  %834 = vmatpush1.msra.mxu0 %v721
  %835 = vmatprep.subr.mxu0 %v726
  %836 = vmatpush1.msra.mxu0 %v725
  %837 = vmatprep.subr.mxu0 %v730
  %838 = vmatpush1.msra.mxu0 %v729
  %839 = vmatprep.subr.mxu0 %v734
  %840 = vmatpush1.msra.mxu0 %v733
  %841 = vmatprep.subr.mxu0 %v738
  %842 = vmatpush1.msra.mxu0 %v737
  %843 = vmatprep.subr.mxu0 %v742
  %844 = vmatpush1.msra.mxu0 %v741
  %845 = vmatprep.subr.mxu0 %v746
  %846 = vmatpush1.msra.mxu0 %v745
  %847 = vmatprep.subr.mxu0 %v750
  %848 = vmatpush1.msra.mxu0 %v749
  %849 = vmatprep.subr.mxu0 0.0
  %850 = vmatpush1.msra.mxu0 0.0
  %851 = vmatprep.subr.mxu0 0.0
  %852 = vmatpush1.msra.mxu0 0.0
  %853 = vmatprep.subr.mxu0 0.0
  %854 = vmatpush1.msra.mxu0 0.0
  %855 = vmatprep.subr.mxu0 0.0
  %856 = vmatpush1.msra.mxu0 0.0
  %857 = vmatprep.subr.mxu0 0.0
  %858 = vmatpush1.msra.mxu0 0.0
  %859 = vmatprep.subr.mxu0 0.0
  %860 = vmatpush1.msra.mxu0 0.0
  %861 = vmatprep.subr.mxu0 0.0
  %862 = vmatpush1.msra.mxu0 0.0
  %863 = vmatprep.subr.mxu0 0.0
  %864 = vmatpush1.msra.mxu0 0.0
  %865 = vmatprep.subr.mxu0 0.0
  %866 = vmatpush1.msra.mxu0 0.0
  %867 = vmatprep.subr.mxu0 0.0
  %868 = vmatpush1.msra.mxu0 0.0
  %869 = vmatprep.subr.mxu0 0.0
  %870 = vmatpush1.msra.mxu0 0.0
  %871 = vmatprep.subr.mxu0 0.0
  %872 = vmatpush1.msra.mxu0 0.0
  %873 = vmatprep.subr.mxu0 0.0
  %874 = vmatpush1.msra.mxu0 0.0
  %875 = vmatprep.subr.mxu0 0.0
  %876 = vmatpush1.msra.mxu0 0.0
  %877 = vmatprep.subr.mxu0 0.0
  %878 = vmatpush1.msra.mxu0 0.0
  %879 = vmatprep.subr.mxu0 0.0
  %880 = vmatpush1.msra.mxu0 0.0
  %881 = vmatprep.subr.mxu0 0.0
  %882 = vmatpush1.msra.mxu0 0.0
  %883 = vmatprep.subr.mxu0 0.0
  %884 = vmatpush1.msra.mxu0 0.0
  %885 = vmatprep.subr.mxu0 0.0
  %886 = vmatpush1.msra.mxu0 0.0
  %887 = vmatprep.subr.mxu0 0.0
  %888 = vmatpush1.msra.mxu0 0.0
  %889 = vmatprep.subr.mxu0 0.0
  %890 = vmatpush1.msra.mxu0 0.0
  %891 = vmatprep.subr.mxu0 0.0
  %892 = vmatpush1.msra.mxu0 0.0
  %893 = vmatprep.subr.mxu0 0.0
  %894 = vmatpush1.msra.mxu0 0.0
  %895 = vmatprep.mubr.f32.mxu0 0.0
  %896 = vmatmul.mubr.f32.gmra.mrb[0].mxu0 %v758
  %v897 = vpop.f32.mrb[0].mxu0
  %v898 = vadd.f32 %v755, %v897
  %v899 = vpop.f32.mrb[0].mxu0
  %v900 = vadd.f32 %v755, %v899
  %901 = vdwg.mxu0
  %v902 = vmax.f32 %v827, 0.0
  %v903 = vmax.f32 %v829, 0.0
  %v904 = vmax.f32 %v898, 0.0
  %v905 = vmax.f32 %v900, 0.0
  %906 = vst [vmem:[%s7] sm:$0xff] %v902
  %907 = vst [vmem:[%s7 + $0x8] sm:$0xff] %v903
  %s908 = scalar_lea.vmem %s7, 16
  %909 = vst [vmem:[%s908] sm:$0xff] %v904
  %910 = vst [vmem:[%s908 + $0x8] sm:$0xff] %v905
  // Predicated region
  $region26: #{fused_forward.1} parent=0 // pred_check
    _
  $region27: #{fused_forward.1} parent=0 // pred_check_branch
    %912 = sbr.rel (0) target = $region29
  $region28: #{fused_forward.1} parent=0 // pred_region
    _
  $region29: #{fused_forward.1} parent=0 // pred_fallthru
    _
  // Predicated region
  $region30: #{fused_forward.1} parent=0 // pred_check
    _
  $region31: #{fused_forward.1} parent=0 // pred_check_branch
    %914 = sbr.rel (0) target = $region33
  $region32: #{fused_forward.1} parent=0 // pred_region
    _
  $region33: #{fused_forward.1} parent=0 // pred_fallthru
    _
  // Predicated region
  $region34: #{fused_forward.1} parent=0 // pred_check
    _
  $region35: #{fused_forward.1} parent=0 // pred_check_branch
    %916 = sbr.rel (0) target = $region37
  $region36: #{fused_forward.1} parent=0 // pred_region
    _
  $region37: #{fused_forward.1} parent=0 // pred_fallthru
    _
  // Predicated region
  $region38: #{fused_forward.1} parent=0 // pred_check
    _
  $region39: #{fused_forward.1} parent=0 // pred_check_branch
    %918 = sbr.rel (0) target = $region41
  $region40: #{fused_forward.1} parent=0 // pred_region
    _
  $region41: #{fused_forward.1} parent=0 // pred_fallthru
    _

</llo_original>
